<compile_context>
chip_gen: v5e
topology: v5e:2x2
jax: 0.10.0
libtpu: 0.0.40
codegen_flags: <defaults>
</compile_context>

<pallas_src>
import functools

import jax
import jax.numpy as jnp
from jax.experimental import pallas as pl
from jax.experimental.pallas import tpu as pltpu


def _logit_kernel(x_ref, w_ref, b_ref, o_ref):
    # x_ref: (TILE_B, D) VMEM   w_ref: (1, D) VMEM   b_ref: (1,) SMEM
    # o_ref: (TILE_B, 1) VMEM
    # Lane-dense VPU multiply (weight row broadcast over batch rows) followed by
    # an XLU lane reduce; f32 accumulation.
    prod = x_ref[...].astype(jnp.float32) * w_ref[...].astype(jnp.float32)
    acc = jnp.sum(prod, axis=-1, keepdims=True)  # (TILE_B, 1)
    o_ref[...] = (acc + b_ref[0]).astype(o_ref.dtype)


@functools.partial(jax.jit, static_argnames=("tile_b",))
def logreg_forward(x, weight, bias, *, tile_b=None):
    """Compute logits = x @ weight.T + bias.

    Args:
      x:      (B, D) float32
      weight: (1, D) float32  (PyTorch nn.Linear convention)
      bias:   (1,)   float32
    Returns:
      (B, 1) float32 logits
    """
    B, D = x.shape

    if tile_b is None:
        # Size against VMEM bytes per row: the minor dim is padded to a multiple
        # of 128 lanes on-chip, so a narrow-D tile occupies (128/D)x its HBM size.
        # Target ~4 MiB of VMEM per x buffer; with double-buffering that is
        # ~8 MiB, safe under the 16 MiB (v5e) / 32 MiB (v6e/v7x) scoped defaults.
        padded_row_bytes = pl.cdiv(D, 128) * 128 * x.dtype.itemsize
        target_rows = max(8, (4 * 1024 * 1024) // padded_row_bytes)
        tile_b = min(B, target_rows)
    tile_b = min(tile_b, B)
    if tile_b < B:
        # Keep tiles sublane-aligned (multiple of 8 rows) when not full-extent.
        tile_b = max(8, (tile_b // 8) * 8)

    grid = (pl.cdiv(B, tile_b),)

    itemsize = x.dtype.itemsize
    cost = pl.CostEstimate(
        flops=2 * B * D,
        transcendentals=0,
        bytes_accessed=B * D * itemsize + D * 4 + 4 + B * 4,
    )

    return pl.pallas_call(
        _logit_kernel,
        out_shape=jax.ShapeDtypeStruct((B, 1), jnp.float32),
        grid=grid,
        in_specs=[
            pl.BlockSpec((tile_b, D), lambda i: (i, 0)),       # x: streamed over batch
            pl.BlockSpec((1, D), lambda i: (0, 0)),            # weight row: resident
            pl.BlockSpec(memory_space=pltpu.SMEM),             # bias scalar in SMEM
        ],
        out_specs=pl.BlockSpec((tile_b, 1), lambda i: (i, 0)),
        compiler_params=pltpu.CompilerParams(
            dimension_semantics=("parallel",),
        ),
        cost_estimate=cost,
    )(x, weight, bias)


if __name__ == "__main__":
    key = jax.random.PRNGKey(0)
    B, D = 8, 32  # batch=8, input_dim=32 (small demo shapes)

    kx, kw, kb, kx2 = jax.random.split(key, 4)
    x = jax.random.normal(kx, (B, D), dtype=jnp.float32)
    # Deterministic parameter init (shapes follow nn.Linear(input_dim, 1)).
    bound = 1.0 / jnp.sqrt(D)
    weight = jax.random.uniform(kw, (1, D), dtype=jnp.float32, minval=-bound, maxval=bound)
    bias = jax.random.uniform(kb, (1,), dtype=jnp.float32, minval=-bound, maxval=bound)

    # Small-shape run (single tile, tile_b == B full extent).
    logits = jax.block_until_ready(logreg_forward(x, weight, bias))
    ref = x @ weight.T + bias
    assert logits.shape == (B, 1)
    assert jnp.allclose(logits, ref, atol=1e-5, rtol=1e-5)

    # Multi-tile run exercising the pipelined batch grid + a partial last tile.
    B2 = 520
    x2 = jax.random.normal(kx2, (B2, D), dtype=jnp.float32)
    logits2 = jax.block_until_ready(logreg_forward(x2, weight, bias, tile_b=256))
    ref2 = x2 @ weight.T + bias
    assert logits2.shape == (B2, 1)
    assert jnp.allclose(logits2, ref2, atol=1e-5, rtol=1e-5)

    # Auto-tiled larger run (tile_b chosen from VMEM budget).
    B3, D3 = 4096, 256
    x3 = jax.random.normal(kx, (B3, D3), dtype=jnp.float32)
    w3 = jax.random.uniform(kw, (1, D3), dtype=jnp.float32, minval=-bound, maxval=bound)
    logits3 = jax.block_until_ready(logreg_forward(x3, w3, bias))
    ref3 = x3 @ w3.T + bias
    assert logits3.shape == (B3, 1)
    assert jnp.allclose(logits3, ref3, atol=1e-4, rtol=1e-4)

    print("KERNEL_OK")
</pallas_src>

<mosaic_0001>
module attributes {stable_mosaic.version = 11 : i64} {
  func.func @_logit_kernel(%arg0: i32, %arg1: memref<8x32xf32, #tpu.memory_space<vmem>>, %arg2: memref<1x32xf32, #tpu.memory_space<vmem>>, %arg3: memref<1xf32, #tpu.memory_space<smem>>, %arg4: memref<8x1xf32, #tpu.memory_space<vmem>>) attributes {dimension_semantics = [#tpu.dimension_semantics<parallel>], iteration_bounds = array<i64: 1>, scalar_prefetch = 0 : i64, scratch_operands = 0 : i64, tpu.core_type = #tpu.core_type<tc>, window_params = [{transform_indices = @transform_0, window_bounds = array<i64: 8, 32>}, {pipeline_mode = #tpu.pipeline_mode<synchronous>, transform_indices = @transform_1, window_bounds = array<i64: 1, 32>}, {transform_indices = @transform_2, window_bounds = array<i64: 1>}, {transform_indices = @transform_3, window_bounds = array<i64: 8, 1>}]} {
    %c0 = arith.constant 0 : index
    %c0_0 = arith.constant 0 : index
    %0 = vector.load %arg1[%c0, %c0_0] : memref<8x32xf32, #tpu.memory_space<vmem>>, vector<8x32xf32>
    %c0_1 = arith.constant 0 : index
    %c0_2 = arith.constant 0 : index
    %1 = vector.load %arg2[%c0_1, %c0_2] : memref<1x32xf32, #tpu.memory_space<vmem>>, vector<1x32xf32>
    %2 = vector.broadcast %1 : vector<1x32xf32> to vector<8x32xf32>
    %3 = arith.mulf %0, %2 : vector<8x32xf32>
    %cst = arith.constant dense<0.000000e+00> : vector<8xf32>
    %4 = vector.multi_reduction <add>, %3, %cst [1] : vector<8x32xf32> to vector<8xf32>
    %5 = vector.shape_cast %4 : vector<8xf32> to vector<8x1xf32>
    %c0_3 = arith.constant 0 : index
    %6 = memref.load %arg3[%c0_3] : memref<1xf32, #tpu.memory_space<smem>>
    %7 = vector.broadcast %6 : f32 to vector<8x1xf32>
    %8 = arith.addf %5, %7 : vector<8x1xf32>
    %c0_4 = arith.constant 0 : index
    %c0_5 = arith.constant 0 : index
    %9 = vector.load %arg4[%c0_4, %c0_5] : memref<8x1xf32, #tpu.memory_space<vmem>>, vector<8x1xf32>
    tpu.vector_store %arg4[%c0_4, %c0_5], %8 {strides = array<i32>} : memref<8x1xf32, #tpu.memory_space<vmem>>, vector<8x1xf32>,
    return
  }
  func.func @transform_0(%arg0: i32) -> (i32, i32) {
    %c0_i32 = arith.constant 0 : i32
    %c0_i32_0 = arith.constant 0 : i32
    return %arg0, %c0_i32 : i32, i32
  }
  func.func @transform_1(%arg0: i32) -> (i32, i32) {
    %c0_i32 = arith.constant 0 : i32
    %c0_i32_0 = arith.constant 0 : i32
    %c0_i32_1 = arith.constant 0 : i32
    return %c0_i32, %c0_i32_0 : i32, i32
  }
  func.func @transform_2(%arg0: i32) -> i32 {
    %c0_i32 = arith.constant 0 : i32
    %c0_i32_0 = arith.constant 0 : i32
    return %c0_i32 : i32
  }
  func.func @transform_3(%arg0: i32) -> (i32, i32) {
    %c0_i32 = arith.constant 0 : i32
    %c0_i32_0 = arith.constant 0 : i32
    return %arg0, %c0_i32 : i32, i32
  }
}

</mosaic_0001>

<llo_original>
// kernel: logreg_forward.1
$region0: #{logreg_forward.1}
  #allocation0 [shape = 'u32[]', space=smem, size = 0x4, offset = 0x4, fixed_abs, tag = 'smem constant byte address 0x4 - core index']
  #allocation1 [shape = 'u32[72,128]{1,0:T(1,128)}', space=vmem, size = 0x9000, scoped, tag = 'internal scratch']
  #allocation2 [shape = 'f32[1]{0:T(128)S(6)}', space=smem, size = 0x200, scoped, tag = 'scoped memory for logreg_forward.1']
  %s0 = inlined_call_operand.hbm [shape: f32[8,32], index: 0, kind: input, shape index: {}]
  %s1 = inlined_call_operand.vmem [shape: f32[1,32], index: 1, kind: input, shape index: {}]
  %s2 = inlined_call_operand.<no memory space> [shape: f32[1], index: 2, kind: input, shape index: {}]
  %s3 = inlined_call_operand.vmem [shape: f32[8,1], index: 3, kind: output, shape index: {}]
  %s4 = sld [smem:[#allocation0]]
  $region26: #{logreg_forward.1} parent=0
    _
  %s6 = ssub.s32 1, %s4
  %s7 = scalar_select 0, %s6, %s4
  %8 = sst [smem:[#allocation2]] %s2
  $region1: #{logreg_forward.1} parent=0
    #allocation3 [shape = 'u8[4096]{0}', space=vmem, size = 0x1000, scoped, tag = 'input window, operand 0, single buffered']
    #allocation4 [shape = 's32[1]{0}', space=sflag, size = 0x4, scoped, tag = 'scoped memory for logreg_forward.1']
    %9 = vsyncpa [#allocation4], 0
    // Predicated region
    $region2: #{logreg_forward.1} parent=1 // pred_check
      _
    $region3: #{logreg_forward.1} parent=1 // pred_check_branch
      %11 = sbr.rel (0) target = $region5
    $region4: #{logreg_forward.1} parent=1 // pred_region
      %13 = vsyncadd [#allocation4], 0
      %s15 = sshll.u32 %s0, 4
      %s16 = int_to_ptr.hbm [resolvable:$true] %s15
      %s17 = sshll.u32 [#allocation3], 4
      %s18 = int_to_ptr.vmem [resolvable:$true] %s17
      %20 = dma.hbm_to_vmem [thread:$0]  %s16, 128, %s18, [#allocation4]
    $region5: #{logreg_forward.1} parent=1 // pred_fallthru
      _
    // Predicated region
    $region6: #{logreg_forward.1} parent=1 // pred_check
      _
    $region7: #{logreg_forward.1} parent=1 // pred_check_branch
      %22 = sbr.rel (0) target = $region9
    $region8: #{logreg_forward.1} parent=1 // pred_region
      _
    $region9: #{logreg_forward.1} parent=1 // pred_fallthru
      _
    // Predicated region
    $region10: #{logreg_forward.1} parent=1 // pred_check
      _
    $region11: #{logreg_forward.1} parent=1 // pred_check_branch
      %24 = sbr.rel (0) target = $region13
    $region12: #{logreg_forward.1} parent=1 // pred_region
      _
    $region13: #{logreg_forward.1} parent=1 // pred_fallthru
      _
    // Predicated region
    $region14: #{logreg_forward.1} parent=1 // pred_check
      _
    $region15: #{logreg_forward.1} parent=1 // pred_check_branch
      %26 = sbr.rel (0) target = $region17
    $region16: #{logreg_forward.1} parent=1 // pred_region
      %28 = dma.done [#allocation4], 128
    $region17: #{logreg_forward.1} parent=1 // pred_fallthru
      _
    %v29 = vld [vmem:[#allocation3] sm:$0xff]
    %v30 = vld [vmem:[%s1] sm:$0x1]
    %v32 = vperm.slane %v30, 0
    %v34 = vmul.f32 %v29, %v32
    %vm35 = vcmask 261120
    %v36 = vsel %vm35, %v34, 0.0
    %37 = vadd.xlane.f32.xlu0 %v36
    %v38 = vpop.xlane.xlu0 %37
    %s39 = sld [smem:[#allocation2]]
    %v40 = vstv %s39
    %v41 = vadd.f32 %v38, %v40
    %vm42 = vcmask 7168
    %43 = vst.msk [vmem:[%s3] sm:$0xff] %vm42, %v41
    // Predicated region
    $region18: #{logreg_forward.1} parent=1 // pred_check
      _
    $region19: #{logreg_forward.1} parent=1 // pred_check_branch
      %45 = sbr.rel (0) target = $region21
    $region20: #{logreg_forward.1} parent=1 // pred_region
      _
    $region21: #{logreg_forward.1} parent=1 // pred_fallthru
      _
    // Predicated region
    $region22: #{logreg_forward.1} parent=1 // pred_check
      _
    $region23: #{logreg_forward.1} parent=1 // pred_check_branch
      %47 = sbr.rel (0) target = $region25
    $region24: #{logreg_forward.1} parent=1 // pred_region
      _
    $region25: #{logreg_forward.1} parent=1 // pred_fallthru
      _
    %48 = vsyncpa [#allocation4], 1

</llo_original>
